<compile_context>
chip_gen: v7x
topology: tpu7x:2x2x1
jax: 0.10.0
libtpu: 0.0.40
codegen_flags: <defaults>
</compile_context>

<pallas_src>
from typing import NamedTuple

import jax
import jax.numpy as jnp
from jax import lax
from jax.experimental import pallas as pl
from jax.experimental.pallas import tpu as pltpu


def _round_up(x, m):
    return ((x + m - 1) // m) * m


def _pick_tile(n, target, align):
    """Aligned tile size that covers n in ceil(n/target) tiles (minimal padding)."""
    n_tiles = max(1, -(-n // target))
    return _round_up(-(-n // n_tiles), align)


class PreparedCenters(NamedTuple):
    centers_dT: jax.Array   # (D, Mp) bf16, rows L2-normalized, zero-padded, transposed
    num_classes: int
    num_centers: int
    m: int                  # C * K (unpadded)
    d: int
    tm: int                 # lane-dense M tile (multiple of 128)


def prepare_centers(centers, *, tm=2048):
    """One-time parameter prep: normalize, pad, transpose, cast to bf16."""
    C, K, D = centers.shape
    M = C * K
    flat = centers.reshape(M, D).astype(jnp.float32)
    # 1 / max(||c||, eps) with eps**2 = 1e-16 (matches torch max(||x||, 1e-8)).
    inv_n = lax.rsqrt(jnp.maximum(jnp.sum(flat * flat, axis=-1, keepdims=True),
                                  jnp.float32(1e-16)))
    normed = flat * inv_n
    # Cap TM so a double-buffered (D, TM) bf16 block stays ~<= 12 MiB.
    tm_cap = max(128, ((6 * 1024 * 1024) // (2 * D)) // 128 * 128)
    TM = _pick_tile(M, min(tm, tm_cap), 128)
    Mp = _round_up(M, TM)
    padded = jnp.pad(normed, ((0, Mp - M), (0, 0)))
    centers_dT = padded.T.astype(jnp.bfloat16)          # (D, Mp), K-major: no vxpose
    return PreparedCenters(centers_dT, C, K, M, D, TM)


def _cl_score_kernel(reps_ref, inv_r_ref, centers_ref, out_ref):
    # reps_ref:    (TB, D)  bf16  (cast hoisted to wrapper)
    # inv_r_ref:   (TB, 1)  f32   (reps inverse norms, hoisted to wrapper)
    # centers_ref: (D, TM)  bf16  (pre-normalized parameter, streamed once)
    # out_ref:     (TB, TM) f32   (lane-dense: TM % 128 == 0 -> unmasked vst)
    dots = lax.dot_general(
        reps_ref[...], centers_ref[...],
        dimension_numbers=(((1,), (0,)), ((), ())),
        preferred_element_type=jnp.float32)
    out_ref[...] = (dots * inv_r_ref[...]).astype(out_ref.dtype)


def cl_model_forward(reps, centers, *, tb=512, tm=2048, force_pallas=False):
    """Pallas equivalent of CLModel.forward(reps, centers, cosine_score).

    reps:    (B, D) float32
    centers: (C, K, D) float32, or a PreparedCenters (recommended: prep once)
    returns: (B, C, K) float32
    """
    prep = centers if isinstance(centers, PreparedCenters) else prepare_centers(
        centers, tm=tm)
    C, K, M, D, TM = prep.num_classes, prep.num_centers, prep.m, prep.d, prep.tm
    B = reps.shape[0]
    assert reps.shape[1] == D

    # Per-call reps prep (once, not once per grid step).
    reps_f32 = reps.astype(jnp.float32)
    sumsq = jnp.sum(reps_f32 * reps_f32, axis=-1, keepdims=True)
    inv_r = lax.rsqrt(jnp.maximum(sumsq, jnp.float32(1e-16)))        # (B, 1) f32
    reps_bf16 = reps_f32.astype(jnp.bfloat16)

    # Tiny-workload fallback: fixed pallas_call / pad / slice overhead dominates.
    if not force_pallas and B * M * D < 1_000_000:
        dots = jnp.dot(reps_bf16, prep.centers_dT[:, :M],
                       preferred_element_type=jnp.float32)
        return (dots * inv_r).reshape(B, C, K)

    # B tile: minimize padding, sublane-aligned, capped by VMEM at large D.
    tb_cap = max(16, ((2 * 1024 * 1024) // (2 * D)) // 16 * 16)
    TB = _pick_tile(B, min(tb, tb_cap), 16)
    Bp = _round_up(B, TB)
    Mp = prep.centers_dT.shape[1]

    reps_p = jnp.pad(reps_bf16, ((0, Bp - B), (0, 0)))
    inv_r_p = jnp.pad(inv_r, ((0, Bp - B), (0, 0)))

    # Grid: M is the SLOW axis, B the FAST axis.  The centers block index is
    # constant across the inner B sweep, so the dominant HBM stream (centers)
    # is fetched exactly once; only the (much smaller) reps are re-streamed.
    grid = (Mp // TM, Bp // TB)

    vmem_bytes = 2 * (TB * D * 2 + TB * 4 + D * TM * 2 + TB * TM * 4) + (4 << 20)
    vmem_limit = int(min(max(vmem_bytes, 16 << 20), 56 << 20))

    out = pl.pallas_call(
        _cl_score_kernel,
        out_shape=jax.ShapeDtypeStruct((Bp, Mp), jnp.float32),
        grid_spec=pltpu.PrefetchScalarGridSpec(
            num_scalar_prefetch=0,
            grid=grid,
            in_specs=[
                pl.BlockSpec((TB, D), lambda j, i: (i, 0)),   # reps (bf16)
                pl.BlockSpec((TB, 1), lambda j, i: (i, 0)),   # 1/||r|| (f32)
                pl.BlockSpec((D, TM), lambda j, i: (0, j)),   # normalized centers^T
            ],
            out_specs=pl.BlockSpec((TB, TM), lambda j, i: (i, j)),
        ),
        compiler_params=pltpu.CompilerParams(
            dimension_semantics=("parallel", "parallel"),
            vmem_limit_bytes=vmem_limit),
    )(reps_p, inv_r_p, prep.centers_dT)

    # Padded rows/cols are exact zeros; slice them off and restore (B, C, K).
    return out[:B, :M].reshape(B, C, K)


def cl_model_forward_ref(reps, centers):
    """Plain-JAX reference mirroring the PyTorch broadcast semantics (f32)."""
    B, D = reps.shape
    C, K, _ = centers.shape
    r = jnp.broadcast_to(reps[:, None, None, :], (B, C, K, D))
    c = jnp.broadcast_to(centers[None, :, :, :], (B, C, K, D))
    eps = 1e-8
    rn = jnp.maximum(jnp.linalg.norm(r, axis=-1), eps)
    cn = jnp.maximum(jnp.linalg.norm(c, axis=-1), eps)
    return jnp.sum(r * c, axis=-1) / (rn * cn)


if __name__ == "__main__":
    key = jax.random.PRNGKey(0)
    k1, k2 = jax.random.split(key)

    B, D = 8, 64              # batch of utterance reps, hidden dim
    C, K = 6, 4               # num_classes, num_centers

    reps = jax.random.normal(k1, (B, D), dtype=jnp.float32)
    centers = jax.random.normal(k2, (C, K, D), dtype=jnp.float32)

    prepared = prepare_centers(centers)                 # one-time parameter prep
    scores = jax.block_until_ready(
        cl_model_forward(reps, prepared, force_pallas=True))
    ref = cl_model_forward_ref(reps, centers)

    assert scores.shape == (B, C, K)
    # bf16 MXU inputs with f32 accumulation: tolerance loosened accordingly.
    assert jnp.allclose(scores, ref, atol=2e-2, rtol=2e-2), (
        float(jnp.max(jnp.abs(scores - ref))))

    print("KERNEL_OK")
</pallas_src>

<mosaic_0001>
module attributes {stable_mosaic.version = 11 : i64} {
  func.func @_cl_score_kernel(%arg0: i32, %arg1: i32, %arg2: memref<16x64xbf16, #tpu.memory_space<vmem>>, %arg3: memref<16x1xf32, #tpu.memory_space<vmem>>, %arg4: memref<64x128xbf16, #tpu.memory_space<vmem>>, %arg5: memref<16x128xf32, #tpu.memory_space<vmem>>) attributes {dimension_semantics = [#tpu.dimension_semantics<parallel>, #tpu.dimension_semantics<parallel>], iteration_bounds = array<i64: 1, 1>, scalar_prefetch = 0 : i64, scratch_operands = 0 : i64, tpu.core_type = #tpu.core_type<tc>, window_params = [{transform_indices = @transform_0, window_bounds = array<i64: 16, 64>}, {transform_indices = @transform_1, window_bounds = array<i64: 16, 1>}, {transform_indices = @transform_2, window_bounds = array<i64: 64, 128>}, {transform_indices = @transform_3, window_bounds = array<i64: 16, 128>}]} {
    %c0 = arith.constant 0 : index
    %c0_0 = arith.constant 0 : index
    %0 = vector.load %arg2[%c0, %c0_0] : memref<16x64xbf16, #tpu.memory_space<vmem>>, vector<16x64xbf16>
    %c0_1 = arith.constant 0 : index
    %c0_2 = arith.constant 0 : index
    %1 = vector.load %arg4[%c0_1, %c0_2] : memref<64x128xbf16, #tpu.memory_space<vmem>>, vector<64x128xbf16>
    %cst = arith.constant dense<0.000000e+00> : vector<16x128xf32>
    %2 = tpu.matmul %0, %1, %cst {dimension_numbers = #tpu.dot_dimension_numbers<[1], [0], [0], [1], [0, 0, 1, 1], [], []>} : vector<16x64xbf16>, vector<64x128xbf16>, vector<16x128xf32> -> vector<16x128xf32>
    %c0_3 = arith.constant 0 : index
    %c0_4 = arith.constant 0 : index
    %3 = vector.load %arg3[%c0_3, %c0_4] : memref<16x1xf32, #tpu.memory_space<vmem>>, vector<16x1xf32>
    %4 = vector.broadcast %3 : vector<16x1xf32> to vector<16x128xf32>
    %5 = arith.mulf %2, %4 : vector<16x128xf32>
    %c0_5 = arith.constant 0 : index
    %c0_6 = arith.constant 0 : index
    %6 = vector.load %arg5[%c0_5, %c0_6] : memref<16x128xf32, #tpu.memory_space<vmem>>, vector<16x128xf32>
    tpu.vector_store %arg5[%c0_5, %c0_6], %5 {strides = array<i32>} : memref<16x128xf32, #tpu.memory_space<vmem>>, vector<16x128xf32>,
    return
  }
  func.func @transform_0(%arg0: i32, %arg1: i32) -> (i32, i32) {
    %c0_i32 = arith.constant 0 : i32
    %c0_i32_0 = arith.constant 0 : i32
    return %arg1, %c0_i32 : i32, i32
  }
  func.func @transform_1(%arg0: i32, %arg1: i32) -> (i32, i32) {
    %c0_i32 = arith.constant 0 : i32
    %c0_i32_0 = arith.constant 0 : i32
    return %arg1, %c0_i32 : i32, i32
  }
  func.func @transform_2(%arg0: i32, %arg1: i32) -> (i32, i32) {
    %c0_i32 = arith.constant 0 : i32
    %c0_i32_0 = arith.constant 0 : i32
    return %c0_i32, %arg0 : i32, i32
  }
  func.func @transform_3(%arg0: i32, %arg1: i32) -> (i32, i32) {
    %c0_i32 = arith.constant 0 : i32
    return %arg1, %arg0 : i32, i32
  }
}

</mosaic_0001>

<llo_original>
// kernel: tpu_custom_call.1
$region0: #{tpu_custom_call.1}
  #allocation0 [shape = 'u32[]', space=smem, size = 0x4, offset = 0x4, fixed_abs, tag = 'smem constant byte address 0x4 - core index']
  #allocation1 [shape = 'u32[144,128]{1,0:T(1,128)}', space=vmem, size = 0x12000, scoped, tag = 'internal scratch']
  %s0 = inlined_call_operand.vmem [shape: bf16[16,64], index: 0, kind: input, shape index: {}]
  %s1 = inlined_call_operand.vmem [shape: f32[16,1], index: 1, kind: input, shape index: {}]
  %s2 = inlined_call_operand.hbm [shape: bf16[64,128], index: 2, kind: input, shape index: {}]
  %s3 = inlined_call_operand.hbm [shape: f32[16,128], index: 3, kind: output, shape index: {}]
  %s4 = sld [smem:[#allocation0]]
  $region26: #{tpu_custom_call.1} parent=0
    _
  %s6 = ssub.s32 1, %s4
  %s7 = scalar_select 0, %s6, %s4
  $region1: #{tpu_custom_call.1} parent=0
    #allocation2 [shape = 'u8[16384]{0}', space=vmem, size = 0x4000, scoped, tag = 'input window, operand 2, single buffered']
    #allocation3 [shape = 's32[1]{0}', space=sflag, size = 0x4, scoped, tag = 'scoped memory for tpu_custom_call.1']
    #allocation4 [shape = 's32[1]{0}', space=sflag, size = 0x4, scoped, tag = 'scoped memory for tpu_custom_call.1']
    #allocation5 [shape = 'u8[8192]{0}', space=vmem, size = 0x2000, scoped, tag = 'output window, operand 0, single buffered']
    %8 = vsyncpa [#allocation3], 0
    %9 = vsyncpa [#allocation4], 0
    // Predicated region
    $region2: #{tpu_custom_call.1} parent=1 // pred_check
      _
    $region3: #{tpu_custom_call.1} parent=1 // pred_check_branch
      %11 = sbr.rel (0) target = $region5
    $region4: #{tpu_custom_call.1} parent=1 // pred_region
      _
    $region5: #{tpu_custom_call.1} parent=1 // pred_fallthru
      _
    // Predicated region
    $region6: #{tpu_custom_call.1} parent=1 // pred_check
      _
    $region7: #{tpu_custom_call.1} parent=1 // pred_check_branch
      %13 = sbr.rel (0) target = $region9
    $region8: #{tpu_custom_call.1} parent=1 // pred_region
      _
    $region9: #{tpu_custom_call.1} parent=1 // pred_fallthru
      _
    // Predicated region
    $region10: #{tpu_custom_call.1} parent=1 // pred_check
      _
    $region11: #{tpu_custom_call.1} parent=1 // pred_check_branch
      %15 = sbr.rel (0) target = $region13
    $region12: #{tpu_custom_call.1} parent=1 // pred_region
      %s17 = ssub.s32 512, 512
      %18 = vsyncadd [#allocation3], %s17
      %s19 = sshll.u32 [#allocation2], 4
      %s20 = int_to_ptr.vmem [resolvable:$true] %s19
      %25 = dma.hbm_to_vmem [thread:$0]  %s2, 512, %s20, [#allocation3], 64, 64, 4
    $region13: #{tpu_custom_call.1} parent=1 // pred_fallthru
      _
    // Predicated region
    $region14: #{tpu_custom_call.1} parent=1 // pred_check
      _
    $region15: #{tpu_custom_call.1} parent=1 // pred_check_branch
      %27 = sbr.rel (0) target = $region17
    $region16: #{tpu_custom_call.1} parent=1 // pred_region
      %28 = dma.done [#allocation3], 512
    $region17: #{tpu_custom_call.1} parent=1 // pred_fallthru
      _
    %v30 = vld [vmem:[%s0] sm:$0xf]
    %v31 = vld [vmem:[%s0 + $0x4] sm:$0xf]
    %v32 = vld [vmem:[#allocation2] sm:$0xf]
    %v33 = vld [vmem:[#allocation2 + $0x4] sm:$0xf]
    %v34 = vld [vmem:[#allocation2 + $0x8] sm:$0xf]
    %v35 = vld [vmem:[#allocation2 + $0xc] sm:$0xf]
    %v36 = vld [vmem:[#allocation2 + $0x10] sm:$0xf]
    %v37 = vld [vmem:[#allocation2 + $0x14] sm:$0xf]
    %v38 = vld [vmem:[#allocation2 + $0x18] sm:$0xf]
    %v39 = vld [vmem:[#allocation2 + $0x1c] sm:$0xf]
    %v42 = vunpack.c.l.b16 %v30
    %v43 = vunpack.c.l.b16 %v31
    %v44 = vpack.c.b16 %v43, %v42
    %v53 = vunpack.c.l.b16 %v32
    %v54 = vunpack.c.l.b16 %v33
    %v55 = vunpack.c.l.b16 %v34
    %v56 = vunpack.c.l.b16 %v35
    %v57 = vunpack.c.l.b16 %v36
    %v58 = vunpack.c.l.b16 %v37
    %v59 = vunpack.c.l.b16 %v38
    %v60 = vunpack.c.l.b16 %v39
    %v61 = vpack.c.b16 %v54, %v53
    %v62 = vpack.c.b16 %v56, %v55
    %v63 = vpack.c.b16 %v58, %v57
    %v64 = vpack.c.b16 %v60, %v59
    %vm69 = vcmask 523264
    %v71 = vsel %vm69, %v44, 0
    %73 = vmatprep.subr.bf16.mxu0 0
    %74 = vmatpush1.bf16.msra.mxu0 %v61
    %75 = vmatprep.subr.bf16.mxu0 0
    %76 = vmatpush1.bf16.msra.mxu0 %v62
    %77 = vmatprep.subr.bf16.mxu0 0
    %78 = vmatpush1.bf16.msra.mxu0 %v63
    %79 = vmatprep.subr.bf16.mxu0 0
    %80 = vmatpush1.bf16.msra.mxu0 %v64
    %81 = vmatprep.subr.bf16.mxu0 0
    %82 = vmatpush1.bf16.msra.mxu0 0
    %83 = vmatprep.subr.bf16.mxu0 0
    %84 = vmatpush1.bf16.msra.mxu0 0
    %85 = vmatprep.subr.bf16.mxu0 0
    %86 = vmatpush1.bf16.msra.mxu0 0
    %87 = vmatprep.subr.bf16.mxu0 0
    %88 = vmatpush1.bf16.msra.mxu0 0
    %89 = vmatprep.subr.bf16.mxu0 0
    %90 = vmatpush1.bf16.msra.mxu0 0
    %91 = vmatprep.subr.bf16.mxu0 0
    %92 = vmatpush1.bf16.msra.mxu0 0
    %93 = vmatprep.subr.bf16.mxu0 0
    %94 = vmatpush1.bf16.msra.mxu0 0
    %95 = vmatprep.subr.bf16.mxu0 0
    %96 = vmatpush1.bf16.msra.mxu0 0
    %97 = vmatprep.subr.bf16.mxu0 0
    %98 = vmatpush1.bf16.msra.mxu0 0
    %99 = vmatprep.subr.bf16.mxu0 0
    %100 = vmatpush1.bf16.msra.mxu0 0
    %101 = vmatprep.subr.bf16.mxu0 0
    %102 = vmatpush1.bf16.msra.mxu0 0
    %103 = vmatprep.subr.bf16.mxu0 0
    %104 = vmatpush1.bf16.msra.mxu0 0
    %105 = vmatprep.mubr.bf16.mxu0 0
    %106 = vmatmul.mubr.bf16.gmra.mrb[0].mxu0 %v71
    %v107 = vpop.f32.mrb[0].mxu0
    %v108 = vadd.f32 0.0, %v107
    %v109 = vpop.f32.mrb[0].mxu0
    %v110 = vpop.f32.mrb[0].mxu0
    %v111 = vadd.f32 0.0, %v110
    %v112 = vpop.f32.mrb[0].mxu0
    %113 = vdwg.mxu0
    %v114 = vld [vmem:[%s1] sm:$0xff]
    %v115 = vld [vmem:[%s1 + $0x8] sm:$0xff]
    %117 = vset.pattern.permute.xlu0 0
    %118 = vperm.xlu0 %117, %v114
    %v119 = vpop.permute.xlu0 %118
    %122 = vset.pattern.permute.xlu0 0
    %123 = vperm.xlu0 %122, %v115
    %v124 = vpop.permute.xlu0 %123
    %v126 = vmul.f32 %v108, %v119
    %v127 = vmul.f32 %v111, %v124
    %128 = vst [vmem:[#allocation5] sm:$0xff] %v126
    %129 = vst [vmem:[#allocation5 + $0x8] sm:$0xff] %v127
    // Predicated region
    $region18: #{tpu_custom_call.1} parent=1 // pred_check
      _
    $region19: #{tpu_custom_call.1} parent=1 // pred_check_branch
      %131 = sbr.rel (0) target = $region21
    $region20: #{tpu_custom_call.1} parent=1 // pred_region
      %s133 = ssub.s32 256, 256
      %134 = vsyncadd [#allocation4], %s133
      %s135 = sshll.u32 [#allocation5], 4
      %s136 = int_to_ptr.vmem [resolvable:$true] %s135
      %141 = dma.vmem_to_hbm [thread:$0]  %s136, 256, %s3, [#allocation4], 128, 128, 8
    $region21: #{tpu_custom_call.1} parent=1 // pred_fallthru
      _
    // Predicated region
    $region22: #{tpu_custom_call.1} parent=1 // pred_check
      _
    $region23: #{tpu_custom_call.1} parent=1 // pred_check_branch
      %143 = sbr.rel (0) target = $region25
    $region24: #{tpu_custom_call.1} parent=1 // pred_region
      %144 = dma.done [#allocation4], 256
    $region25: #{tpu_custom_call.1} parent=1 // pred_fallthru
      _
    %145 = vsyncpa [#allocation3], 1
    %146 = vsyncpa [#allocation4], 1

</llo_original>
